<compile_context>
chip_gen: v6e
topology: v6e:2x2x1
jax: 0.10.0
libtpu: 0.0.40
codegen_flags: <defaults>
</compile_context>

<pallas_src>
import jax
import jax.numpy as jnp
from jax.experimental import pallas as pl
from jax.experimental.pallas import tpu as pltpu


def _binary_head_kernel(x_ref, w_ref, b_ref, o_ref, xn_ref):
    # x_ref : (tb, E)   feature tile, resident across the N axis
    # w_ref : (E, tn)   column tile of the pre-scaled, transposed linear weight
    # b_ref : (1, tn)   tile of the pre-scaled bias (f32)
    # o_ref : (tb, tn)  output logits tile (f32)
    # xn_ref: (tb, E)   VMEM scratch holding the l2-normalized features

    # Normalize once per B-tile (first N-step); later N-steps reuse the scratch.
    @pl.when(pl.program_id(1) == 0)
    def _():
        x = x_ref[...].astype(jnp.float32)
        ssq = jnp.sum(x * x, axis=1, keepdims=True)
        # rsqrt (EUP slot) + multiply (VPU) instead of sqrt + divide.
        # Tiny clamp only guards all-zero rows (torch.div would give inf/nan there).
        inv = jax.lax.rsqrt(jnp.maximum(ssq, 1e-24))
        xn_ref[...] = x * inv

    w = w_ref[...]
    logit = jnp.dot(xn_ref[...].astype(w.dtype), w,
                    preferred_element_type=jnp.float32)
    o_ref[...] = (logit + b_ref[...]).astype(o_ref.dtype)


def prepare_binary_head_params(weight, bias, *, s=16.0,
                               weight_dtype=jnp.float32, lane=128):
    """One-time parameter transform (do offline, not per forward call).

    weight: [num_class, emb_size] (PyTorch nn.Linear layout); bias: [num_class].
    Returns (weight_t [E, Npad], bias2d [1, Npad]) with `s` folded in and N padded
    to a multiple of `lane`.
    """
    n, e = weight.shape
    n_pad = ((n + lane - 1) // lane) * lane
    w_t = (weight.astype(jnp.float32) * s).T.astype(weight_dtype)   # [E, N]
    b = bias.astype(jnp.float32) * s
    if n_pad != n:
        w_t = jnp.pad(w_t, ((0, 0), (0, n_pad - n)))
        b = jnp.pad(b, (0, n_pad - n))
    return w_t, b.reshape(1, n_pad)


def _pick_tn(e, n_pad, w_itemsize, per_buffer_cap_bytes):
    # Largest lane-dense tile that divides Npad and keeps one double-buffered weight
    # tile within the per-buffer VMEM budget.
    for tn in (2048, 1024, 512, 256, 128):
        if n_pad % tn == 0 and e * tn * w_itemsize <= per_buffer_cap_bytes:
            return tn
    return 128 if n_pad % 128 == 0 else n_pad


def _pick_tb(b, max_tb=256):
    if b <= max_tb:
        return b
    for tb in (256, 128, 64, 32, 16, 8):
        if b % tb == 0:
            return tb
    return b


def binary_head_forward(fea, weight_t, bias2d, *, num_class=None, tn=None,
                        vmem_cap_bytes=48 << 20):
    """fea: [B, E]; weight_t: [E, Npad] (s folded in); bias2d: [1, Npad] (s folded in).

    Returns logits [B, num_class] (or [B, Npad] if num_class is None), float32.
    """
    b, e = fea.shape
    e2, n_pad = weight_t.shape
    assert e == e2, (e, e2)
    assert bias2d.shape == (1, n_pad)

    w_itemsize = jnp.dtype(weight_t.dtype).itemsize
    if tn is None:
        tn = _pick_tn(e, n_pad, w_itemsize, vmem_cap_bytes // 4)
    assert n_pad % tn == 0 and (tn % 128 == 0 or tn == n_pad), (n_pad, tn)
    tb = _pick_tb(b)
    assert b % tb == 0 and (tb % 8 == 0 or tb == b), (b, tb)

    grid = (b // tb, n_pad // tn)

    # VMEM: x (2x), weight (2x), bias (2x), out (2x), xn scratch (1x) + headroom,
    # clamped to a limit that is safe on v5e/v6e (128 MiB phys) and v7x (64 MiB phys).
    need = (2 * tb * e * 4 + 2 * e * tn * w_itemsize + 2 * tn * 4
            + 2 * tb * tn * 4 + tb * e * 4)
    vmem_limit = int(min(max(2 * need, 32 << 20), vmem_cap_bytes))

    out = pl.pallas_call(
        _binary_head_kernel,
        out_shape=jax.ShapeDtypeStruct((b, n_pad), jnp.float32),
        grid_spec=pltpu.PrefetchScalarGridSpec(
            num_scalar_prefetch=0,
            grid=grid,
            in_specs=[
                pl.BlockSpec((tb, e), lambda i, j: (i, 0)),   # features (resident over j)
                pl.BlockSpec((e, tn), lambda i, j: (0, j)),   # weight column tile
                pl.BlockSpec((1, tn), lambda i, j: (0, j)),   # bias tile
            ],
            out_specs=pl.BlockSpec((tb, tn), lambda i, j: (i, j)),
            scratch_shapes=[pltpu.VMEM((tb, e), jnp.float32)],  # normalized features
        ),
        compiler_params=pltpu.CompilerParams(
            dimension_semantics=("parallel", "arbitrary"),
            vmem_limit_bytes=vmem_limit),
    )(fea, weight_t, bias2d)

    if num_class is not None and num_class != n_pad:
        out = out[:, :num_class]
    return out


if __name__ == "__main__":
    # Small synthetic config consistent with BinaryHead(num_class, emb_size, s).
    B, EMB, NUM_CLASS, S = 8, 128, 500, 16.0

    key = jax.random.PRNGKey(0)
    k_x, k_w, k_b = jax.random.split(key, 3)

    fea = jax.random.normal(k_x, (B, EMB), dtype=jnp.float32)
    weight = jax.random.normal(k_w, (NUM_CLASS, EMB), dtype=jnp.float32) * 0.02  # nn.Linear [N, E]
    bias = jax.random.normal(k_b, (NUM_CLASS,), dtype=jnp.float32) * 0.01

    # Pure-JAX reference (same math as the PyTorch module).
    norm = jnp.sqrt(jnp.sum(fea * fea, axis=1, keepdims=True))
    xn = fea / norm
    ref = (xn @ weight.T + bias[None, :]) * S

    # f32-weight path; force tn=128 so the padded-N, multi-step, reused-scratch path runs.
    w_t32, b2d32 = prepare_binary_head_params(weight, bias, s=S, weight_dtype=jnp.float32)
    logits32 = binary_head_forward(fea, w_t32, b2d32, num_class=NUM_CLASS, tn=128)
    jax.block_until_ready(logits32)
    assert logits32.shape == (B, NUM_CLASS)
    assert jnp.allclose(logits32, ref, atol=1e-3, rtol=1e-3), float(
        jnp.max(jnp.abs(logits32 - ref)))

    # bf16-weight path (halves the dominant weight HBM traffic); automatic tile selection.
    w_t16, b2d16 = prepare_binary_head_params(weight, bias, s=S, weight_dtype=jnp.bfloat16)
    logits16 = binary_head_forward(fea, w_t16, b2d16, num_class=NUM_CLASS)
    jax.block_until_ready(logits16)
    assert logits16.shape == (B, NUM_CLASS)
    assert jnp.allclose(logits16, ref, atol=5e-2, rtol=5e-2), float(
        jnp.max(jnp.abs(logits16 - ref)))

    print("KERNEL_OK")
</pallas_src>

<mosaic_0001>
module attributes {stable_mosaic.version = 11 : i64} {
  func.func @_binary_head_kernel(%arg0: i32, %arg1: i32, %arg2: memref<8x128xf32, #tpu.memory_space<vmem>>, %arg3: memref<128x128xf32, #tpu.memory_space<vmem>>, %arg4: memref<1x128xf32, #tpu.memory_space<vmem>>, %arg5: memref<8x128xf32, #tpu.memory_space<vmem>>, %arg6: memref<8x128xf32, #tpu.memory_space<vmem>>) attributes {dimension_semantics = [#tpu.dimension_semantics<parallel>, #tpu.dimension_semantics<arbitrary>], iteration_bounds = array<i64: 1, 4>, scalar_prefetch = 0 : i64, scratch_operands = 1 : i64, tpu.core_type = #tpu.core_type<tc>, window_params = [{transform_indices = @transform_0, window_bounds = array<i64: 8, 128>}, {transform_indices = @transform_1, window_bounds = array<i64: 128, 128>}, {transform_indices = @transform_2, window_bounds = array<i64: 1, 128>}, {transform_indices = @transform_3, window_bounds = array<i64: 8, 128>}]} {
    %c0_i32 = arith.constant 0 : i32
    %0 = arith.cmpi eq, %arg1, %c0_i32 : i32
    %1 = arith.extui %0 : i1 to i32
    %c0_i32_0 = arith.constant 0 : i32
    %2 = arith.cmpi ne, %1, %c0_i32_0 : i32
    scf.if %2 {
      %c0_8 = arith.constant 0 : index
      %c0_9 = arith.constant 0 : index
      %10 = vector.load %arg2[%c0_8, %c0_9] : memref<8x128xf32, #tpu.memory_space<vmem>>, vector<8x128xf32>
      %11 = arith.mulf %10, %10 : vector<8x128xf32>
      %cst_10 = arith.constant dense<0.000000e+00> : vector<8xf32>
      %12 = vector.multi_reduction <add>, %11, %cst_10 [1] : vector<8x128xf32> to vector<8xf32>
      %13 = vector.shape_cast %12 : vector<8xf32> to vector<8x1xf32>
      %cst_11 = arith.constant 1.000000e-24 : f32
      %14 = vector.broadcast %cst_11 : f32 to vector<8x1xf32>
      %15 = arith.maximumf %13, %14 : vector<8x1xf32>
      %16 = math.rsqrt %15 : vector<8x1xf32>
      %17 = vector.broadcast %16 : vector<8x1xf32> to vector<8x128xf32>
      %18 = arith.mulf %10, %17 : vector<8x128xf32>
      %c0_12 = arith.constant 0 : index
      %c0_13 = arith.constant 0 : index
      %19 = vector.load %arg6[%c0_12, %c0_13] : memref<8x128xf32, #tpu.memory_space<vmem>>, vector<8x128xf32>
      tpu.vector_store %arg6[%c0_12, %c0_13], %18 {strides = array<i32>} : memref<8x128xf32, #tpu.memory_space<vmem>>, vector<8x128xf32>,
    } else {
    }
    %c0 = arith.constant 0 : index
    %c0_1 = arith.constant 0 : index
    %3 = vector.load %arg3[%c0, %c0_1] : memref<128x128xf32, #tpu.memory_space<vmem>>, vector<128x128xf32>
    %c0_2 = arith.constant 0 : index
    %c0_3 = arith.constant 0 : index
    %4 = vector.load %arg6[%c0_2, %c0_3] : memref<8x128xf32, #tpu.memory_space<vmem>>, vector<8x128xf32>
    %cst = arith.constant dense<0.000000e+00> : vector<8x128xf32>
    %5 = tpu.matmul %4, %3, %cst {dimension_numbers = #tpu.dot_dimension_numbers<[1], [0], [0], [1], [0, 0, 1, 1], [], []>} : vector<8x128xf32>, vector<128x128xf32>, vector<8x128xf32> -> vector<8x128xf32>
    %c0_4 = arith.constant 0 : index
    %c0_5 = arith.constant 0 : index
    %6 = vector.load %arg4[%c0_4, %c0_5] : memref<1x128xf32, #tpu.memory_space<vmem>>, vector<1x128xf32>
    %7 = vector.broadcast %6 : vector<1x128xf32> to vector<8x128xf32>
    %8 = arith.addf %5, %7 : vector<8x128xf32>
    %c0_6 = arith.constant 0 : index
    %c0_7 = arith.constant 0 : index
    %9 = vector.load %arg5[%c0_6, %c0_7] : memref<8x128xf32, #tpu.memory_space<vmem>>, vector<8x128xf32>
    tpu.vector_store %arg5[%c0_6, %c0_7], %8 {strides = array<i32>} : memref<8x128xf32, #tpu.memory_space<vmem>>, vector<8x128xf32>,
    return
  }
  func.func @transform_0(%arg0: i32, %arg1: i32) -> (i32, i32) {
    %c0_i32 = arith.constant 0 : i32
    %c0_i32_0 = arith.constant 0 : i32
    return %arg0, %c0_i32 : i32, i32
  }
  func.func @transform_1(%arg0: i32, %arg1: i32) -> (i32, i32) {
    %c0_i32 = arith.constant 0 : i32
    %c0_i32_0 = arith.constant 0 : i32
    return %c0_i32, %arg1 : i32, i32
  }
  func.func @transform_2(%arg0: i32, %arg1: i32) -> (i32, i32) {
    %c0_i32 = arith.constant 0 : i32
    %c0_i32_0 = arith.constant 0 : i32
    return %c0_i32, %arg1 : i32, i32
  }
  func.func @transform_3(%arg0: i32, %arg1: i32) -> (i32, i32) {
    %c0_i32 = arith.constant 0 : i32
    return %arg0, %arg1 : i32, i32
  }
}

</mosaic_0001>

<llo_original>
// kernel: tpu_custom_call.1
$region0: #{tpu_custom_call.1}
  #allocation0 [shape = 'u32[]', space=smem, size = 0x4, offset = 0x4, fixed_abs, tag = 'smem constant byte address 0x4 - core index']
  #allocation1 [shape = 'u32[144,128]{1,0:T(1,128)}', space=vmem, size = 0x12000, scoped, tag = 'internal scratch']
  #allocation2 [shape = 'f32[8,128]{1,0:T(8,128)}', space=vmem, size = 0x1000, scoped, tag = 'scratch operand']
  %s0 = inlined_call_operand.hbm [shape: f32[8,128], index: 0, kind: input, shape index: {}]
  %s1 = inlined_call_operand.hbm [shape: f32[128,512], index: 1, kind: input, shape index: {}]
  %s2 = inlined_call_operand.hbm [shape: f32[1,512], index: 2, kind: input, shape index: {}]
  %s3 = inlined_call_operand.hbm [shape: f32[8,512], index: 3, kind: output, shape index: {}]
  %s4 = sld [smem:[#allocation0]]
  $region61: #{tpu_custom_call.1} parent=0
    _
  %s6 = ssub.s32 1, %s4
  %s7 = scalar_select 0, %s6, %s4
  $region1: #{tpu_custom_call.1} parent=0
    #allocation3 [shape = 'u8[4096]{0}', space=vmem, size = 0x1000, scoped, tag = 'input window, operand 0, single buffered']
    #allocation4 [shape = 's32[2]{0}', space=sflag, size = 0x8, scoped, tag = 'scoped memory for tpu_custom_call.1']
    #allocation5 [shape = 's32[2]{0}', space=sflag, size = 0x8, scoped, tag = 'scoped memory for tpu_custom_call.1']
    #allocation6 [shape = 'u8[131072]{0}', space=vmem, size = 0x20000, scoped, tag = 'input window, operand 1']
    #allocation7 [shape = 's32[2]{0}', space=sflag, size = 0x8, scoped, tag = 'scoped memory for tpu_custom_call.1']
    #allocation8 [shape = 'u8[1024]{0}', space=vmem, size = 0x400, scoped, tag = 'input window, operand 2']
    #allocation9 [shape = 'u8[8192]{0}', space=vmem, size = 0x2000, scoped, tag = 'output window, operand 0']
    %8 = vsyncpa [#allocation4], 0
    %9 = vsyncpa [#allocation7], 0
    %s10 = scalar_lea.sflag [#allocation7], 1
    %11 = vsyncpa %s10, 0
    %12 = vsyncpa [#allocation5], 0
    %s13 = scalar_lea.sflag [#allocation5], 1
    %14 = vsyncpa %s13, 0
    loop: start=0, step=1, limit=6
    $region2: #{tpu_custom_call.1} parent=1 // loop_pre_header
      _
    $region3: #{tpu_custom_call.1} parent=1 // loop_header
      %s16 = sphi 0, %s20
      %p17 = scmp.ge.s32.totalorder %s16, 6
      %s23 = sphi 0, %s35
      %s24 = sphi 0, %s31
      %s25 = sphi 0, %s23
      %s26 = sphi 0, %s24
      %s27 = sphi 0, %s25
      %s28 = sphi 0, %s26
      %s38 = sphi 0, %s40
      %s41 = sphi 0, %s38
      %s42 = sphi 0, %s41
      %s58 = sphi 0, %s42
      %s64 = sphi 0, %s66
      %s67 = sphi 0, %s64
      %s68 = sphi 0, %s67
      %s84 = sphi 0, %s68
      %s90 = sphi 0, %s92
      %s93 = sphi 0, %s90
      %s94 = sphi 0, %s93
      %s110 = sphi 0, %s94
      %s118 = sphi 0, %s120
      %s121 = sphi 0, %s118
      %s122 = sphi 0, %s121
      %s138 = sphi 0, %s122
    $region4: #{tpu_custom_call.1} parent=1 // loop_header_branch
      %19 = sbr.rel (%p17) target = $region8
    $region5: #{tpu_custom_call.1} parent=1 // loop_body
      %s21 = ssub.s32 %s16, 1
      %s22 = ssub.s32 %s16, 2
      %s29 = sadd.s32 1, %s24
      %p30 = scmp.ge.s32.totalorder %s29, 4
      %s31 = scalar_select %p30, 0, %s29
      %s32 = sadd.s32 1, %s23
      %s33 = scalar_select %p30, %s32, %s23
      %p34 = scmp.ge.s32.totalorder %s33, 1
      %s35 = scalar_select %p34, 0, %s33
      %s36 = ssub.s32 %s23, %s35
      %p37 = scmp.eq.s32.totalorder %s36, 0
      %s39 = sadd.s32 %s38, 1
      %s40 = scalar_select %p37, %s38, %s39
      %p43 = pneg %p37
      %p44 = scmp.eq.s32.totalorder %s16, 3
      %p45 = por %p43, %p44
      %p46 = scmp.ne.s32.totalorder %s38, %s41
      %p47 = scmp.eq.s32.totalorder %s16, 0
      %p48 = por %p46, %p47
      %p49 = scmp.ne.s32.totalorder %s38, %s41
      %p50 = scmp.eq.s32.totalorder %s21, 3
      %p51 = por %p49, %p50
      %p52 = scmp.ne.s32.totalorder %s41, %s42
      %p53 = scmp.eq.s32.totalorder %s21, 0
      %p54 = por %p52, %p53
      %p55 = scmp.ne.s32.totalorder %s41, %s42
      %p56 = scmp.eq.s32.totalorder %s22, 3
      %p57 = por %p55, %p56
      %p59 = scmp.ne.s32.totalorder %s42, %s58
      %p60 = scmp.eq.s32.totalorder %s22, 0
      %p61 = por %p59, %p60
      %s62 = ssub.s32 %s24, %s31
      %p63 = scmp.eq.s32.totalorder %s62, 0
      %s65 = sadd.s32 %s64, 1
      %s66 = scalar_select %p63, %s64, %s65
      %p69 = pneg %p63
      %p70 = scmp.eq.s32.totalorder %s16, 3
      %p71 = por %p69, %p70
      %p72 = scmp.ne.s32.totalorder %s64, %s67
      %p73 = scmp.eq.s32.totalorder %s16, 0
      %p74 = por %p72, %p73
      %p75 = scmp.ne.s32.totalorder %s64, %s67
      %p76 = scmp.eq.s32.totalorder %s21, 3
      %p77 = por %p75, %p76
      %p78 = scmp.ne.s32.totalorder %s67, %s68
      %p79 = scmp.eq.s32.totalorder %s21, 0
      %p80 = por %p78, %p79
      %p81 = scmp.ne.s32.totalorder %s67, %s68
      %p82 = scmp.eq.s32.totalorder %s22, 3
      %p83 = por %p81, %p82
      %p85 = scmp.ne.s32.totalorder %s68, %s84
      %p86 = scmp.eq.s32.totalorder %s22, 0
      %p87 = por %p85, %p86
      %s88 = ssub.s32 %s24, %s31
      %p89 = scmp.eq.s32.totalorder %s88, 0
      %s91 = sadd.s32 %s90, 1
      %s92 = scalar_select %p89, %s90, %s91
      %p95 = pneg %p89
      %p96 = scmp.eq.s32.totalorder %s16, 3
      %p97 = por %p95, %p96
      %p98 = scmp.ne.s32.totalorder %s90, %s93
      %p99 = scmp.eq.s32.totalorder %s16, 0
      %p100 = por %p98, %p99
      %p101 = scmp.ne.s32.totalorder %s90, %s93
      %p102 = scmp.eq.s32.totalorder %s21, 3
      %p103 = por %p101, %p102
      %p104 = scmp.ne.s32.totalorder %s93, %s94
      %p105 = scmp.eq.s32.totalorder %s21, 0
      %p106 = por %p104, %p105
      %p107 = scmp.ne.s32.totalorder %s93, %s94
      %p108 = scmp.eq.s32.totalorder %s22, 3
      %p109 = por %p107, %p108
      %p111 = scmp.ne.s32.totalorder %s94, %s110
      %p112 = scmp.eq.s32.totalorder %s22, 0
      %p113 = por %p111, %p112
      %s114 = ssub.s32 %s23, %s35
      %s115 = ssub.s32 %s24, %s31
      %s116 = sor.u32 %s114, %s115
      %p117 = scmp.eq.s32.totalorder %s116, 0
      %s119 = sadd.s32 %s118, 1
      %s120 = scalar_select %p117, %s118, %s119
      %p123 = pneg %p117
      %p124 = scmp.eq.s32.totalorder %s16, 3
      %p125 = por %p123, %p124
      %p126 = scmp.ne.s32.totalorder %s118, %s121
      %p127 = scmp.eq.s32.totalorder %s16, 0
      %p128 = por %p126, %p127
      %p129 = scmp.ne.s32.totalorder %s118, %s121
      %p130 = scmp.eq.s32.totalorder %s21, 3
      %p131 = por %p129, %p130
      %p132 = scmp.ne.s32.totalorder %s121, %s122
      %p133 = scmp.eq.s32.totalorder %s21, 0
      %p134 = por %p132, %p133
      %p135 = scmp.ne.s32.totalorder %s121, %s122
      %p136 = scmp.eq.s32.totalorder %s22, 3
      %p137 = por %p135, %p136
      %p139 = scmp.ne.s32.totalorder %s122, %s138
      %p140 = scmp.eq.s32.totalorder %s22, 0
      %p141 = por %p139, %p140
      %p142 = scmp.le.s32.totalorder 1, %s16
      %p143 = scmp.lt.s32.totalorder %s16, 5
      %p144 = pnand %p142, %p143
      %p145 = pneg %p144
      // Predicated region
      $region9: #{tpu_custom_call.1} parent=5 // pred_check
        _
      $region10: #{tpu_custom_call.1} parent=5 // pred_check_branch
        %147 = sbr.rel (%p144) target = $region12
      $region11: #{tpu_custom_call.1} parent=5 // pred_region
        %s148 = ssub.s32 %s16, 1
        // Predicated region
        $region13: #{tpu_custom_call.1} parent=11 // pred_check
          %p149 = pneg %p54
        $region14: #{tpu_custom_call.1} parent=11 // pred_check_branch
          %151 = sbr.rel (%p149) target = $region16
        $region15: #{tpu_custom_call.1} parent=11 // pred_region
          %s153 = ssub.s32 128, 128
          %154 = vsyncadd [#allocation4], %s153
          %s155 = smul.addr %s25, 128
          %s156 = scalar_lea.hbm %s0, %s155
          %s158 = sshll.u32 [#allocation3], 4
          %s159 = int_to_ptr.vmem [resolvable:$true] %s158
          %161 = dma.hbm_to_vmem [thread:$0]  %s156, 128, %s159, [#allocation4]
        $region16: #{tpu_custom_call.1} parent=11 // pred_fallthru
          _
      $region12: #{tpu_custom_call.1} parent=5 // pred_fallthru
        _
      %p162 = scmp.lt.s32.totalorder %s16, 4
      // Predicated region
      $region17: #{tpu_custom_call.1} parent=5 // pred_check
        %p163 = pneg %p162
      $region18: #{tpu_custom_call.1} parent=5 // pred_check_branch
        %165 = sbr.rel (%p163) target = $region20
      $region19: #{tpu_custom_call.1} parent=5 // pred_region
        // Predicated region
        $region21: #{tpu_custom_call.1} parent=19 // pred_check
          %p166 = pneg %p74
        $region22: #{tpu_custom_call.1} parent=19 // pred_check_branch
          %168 = sbr.rel (%p166) target = $region24
        $region23: #{tpu_custom_call.1} parent=19 // pred_region
          %s169 = sand.u32 %s16, 1
          %s170 = scalar_lea.sflag [#allocation7], %s169
          %s171 = sand.u32 %s64, 1
          %s172 = smul.addr %s171, 128
          %s173 = scalar_lea.vmem [#allocation6], %s172
          %s175 = ssub.s32 2048, 2048
          %176 = vsyncadd %s170, %s175
          %s177 = smul.addr %s24, 128
          %s178 = scalar_lea.hbm %s1, %s177
          %s179 = sshll.u32 %s173, 4
          %s180 = int_to_ptr.vmem [resolvable:$true] %s179
          %185 = dma.hbm_to_vmem [thread:$0]  %s178, 2048, %s180, %s170, 512, 128, 8
        $region24: #{tpu_custom_call.1} parent=19 // pred_fallthru
          _
        // Predicated region
        $region25: #{tpu_custom_call.1} parent=19 // pred_check
          %p186 = pneg %p100
        $region26: #{tpu_custom_call.1} parent=19 // pred_check_branch
          %188 = sbr.rel (%p186) target = $region28
        $region27: #{tpu_custom_call.1} parent=19 // pred_region
          %s189 = sand.u32 %s16, 1
          %s190 = scalar_lea.sflag [#allocation7], %s189
          %s191 = sand.u32 %s90, 1
          %s192 = scalar_lea.vmem [#allocation8], %s191
          %s194 = ssub.s32 16, 16
          %195 = vsyncadd %s190, %s194
          %s196 = smul.addr %s24, 16
          %s197 = scalar_lea.hbm %s2, %s196
          %s199 = sshll.u32 %s192, 4
          %s200 = int_to_ptr.vmem [resolvable:$true] %s199
          %202 = dma.hbm_to_vmem [thread:$0]  %s197, 16, %s200, %s190
        $region28: #{tpu_custom_call.1} parent=19 // pred_fallthru
          _
      $region20: #{tpu_custom_call.1} parent=5 // pred_fallthru
        _
      %p203 = scmp.le.s32.totalorder 1, %s16
      %p204 = scmp.lt.s32.totalorder %s16, 5
      %p205 = pnand %p203, %p204
      %p206 = pneg %p205
      // Predicated region
      $region29: #{tpu_custom_call.1} parent=5 // pred_check
        _
      $region30: #{tpu_custom_call.1} parent=5 // pred_check_branch
        %208 = sbr.rel (%p205) target = $region32
      $region31: #{tpu_custom_call.1} parent=5 // pred_region
        %s209 = ssub.s32 %s16, 1
        // Predicated region
        $region33: #{tpu_custom_call.1} parent=31 // pred_check
          %p210 = pneg %p54
        $region34: #{tpu_custom_call.1} parent=31 // pred_check_branch
          %212 = sbr.rel (%p210) target = $region36
        $region35: #{tpu_custom_call.1} parent=31 // pred_region
          %213 = dma.done [#allocation4], 128
        $region36: #{tpu_custom_call.1} parent=31 // pred_fallthru
          _
        %s214 = sand.u32 %s21, 1
        %s215 = scalar_lea.sflag [#allocation7], %s214
        %s216 = sand.u32 %s67, 1
        %s217 = smul.addr %s216, 128
        %s218 = scalar_lea.vmem [#allocation6], %s217
        // Predicated region
        $region37: #{tpu_custom_call.1} parent=31 // pred_check
          %p219 = pneg %p80
        $region38: #{tpu_custom_call.1} parent=31 // pred_check_branch
          %221 = sbr.rel (%p219) target = $region40
        $region39: #{tpu_custom_call.1} parent=31 // pred_region
          %222 = dma.done %s215, 2048
        $region40: #{tpu_custom_call.1} parent=31 // pred_fallthru
          _
        %s223 = sand.u32 %s21, 1
        %s224 = scalar_lea.sflag [#allocation7], %s223
        %s225 = sand.u32 %s93, 1
        %s226 = scalar_lea.vmem [#allocation8], %s225
        // Predicated region
        $region41: #{tpu_custom_call.1} parent=31 // pred_check
          %p227 = pneg %p106
        $region42: #{tpu_custom_call.1} parent=31 // pred_check_branch
          %229 = sbr.rel (%p227) target = $region44
        $region43: #{tpu_custom_call.1} parent=31 // pred_region
          %230 = dma.done %s224, 16
        $region44: #{tpu_custom_call.1} parent=31 // pred_fallthru
          _
        %p231 = pneg %p54
        %p232 = pneg %p51
        %s233 = sand.u32 %s21, 1
        %s234 = scalar_lea.sflag [#allocation7], %s233
        %s235 = sand.u32 %s67, 1
        %s236 = smul.addr %s235, 128
        %s237 = scalar_lea.vmem [#allocation6], %s236
        %p238 = pneg %p80
        %p239 = pneg %p77
        %s240 = sand.u32 %s21, 1
        %s241 = scalar_lea.sflag [#allocation7], %s240
        %s242 = sand.u32 %s93, 1
        %s243 = scalar_lea.vmem [#allocation8], %s242
        %p244 = pneg %p106
        %p245 = pneg %p103
        %p246 = pneg %p134
        %p247 = pneg %p131
        %s248 = sand.u32 %s121, 1
        %s249 = scalar_lea.sflag [#allocation5], %s248
        %s250 = sand.u32 %s121, 1
        %s251 = smul.addr %s250, 8
        %s252 = scalar_lea.vmem [#allocation9], %s251
        %p253 = scmp.eq.s32.totalorder %s26, 0
        // Predicated region
        $region45: #{tpu_custom_call.1} parent=31 // pred_check
          %p254 = pneg %p253
        $region46: #{tpu_custom_call.1} parent=31 // pred_check_branch
          %256 = sbr.rel (%p254) target = $region48
        $region47: #{tpu_custom_call.1} parent=31 // pred_region
          %v257 = vld [vmem:[#allocation3] sm:$0xff]
          %v258 = vmul.f32 %v257, %v257
          %259 = vadd.xlane.f32.xlu0 %v258
          %v260 = vpop.xlane.xlu0 %259
          %v261 = vmax.f32 %v260, 1e-24
          %v262 = vrsqrt.pop %v261
          %v263 = vmul.f32 %v257, %v262
          %264 = vst [vmem:[#allocation2] sm:$0xff] %v263
        $region48: #{tpu_custom_call.1} parent=31 // pred_fallthru
          _
        %v265 = vld [vmem:[%s218] sm:$0xff]
        %v266 = vld [vmem:[%s218 + $0x8] sm:$0xff]
        %v267 = vld [vmem:[%s218 + $0x10] sm:$0xff]
        %v268 = vld [vmem:[%s218 + $0x18] sm:$0xff]
        %v269 = vld [vmem:[%s218 + $0x20] sm:$0xff]
        %v270 = vld [vmem:[%s218 + $0x28] sm:$0xff]
        %v271 = vld [vmem:[%s218 + $0x30] sm:$0xff]
        %v272 = vld [vmem:[%s218 + $0x38] sm:$0xff]
        %v273 = vld [vmem:[%s218 + $0x40] sm:$0xff]
        %v274 = vld [vmem:[%s218 + $0x48] sm:$0xff]
        %v275 = vld [vmem:[%s218 + $0x50] sm:$0xff]
        %v276 = vld [vmem:[%s218 + $0x58] sm:$0xff]
        %v277 = vld [vmem:[%s218 + $0x60] sm:$0xff]
        %v278 = vld [vmem:[%s218 + $0x68] sm:$0xff]
        %v279 = vld [vmem:[%s218 + $0x70] sm:$0xff]
        %v280 = vld [vmem:[%s218 + $0x78] sm:$0xff]
        %v281 = vld [vmem:[#allocation2] sm:$0xff]
        %v282 = vld [vmem:[%s226] sm:$0x1]
        %v284 = vlaneseq
        %v285 = vshrl.u32 %v284, 7
        %v286 = vsub.s32 0, %v285
        %v287 = vrot.slane %v282, %v286
        %289 = vmatprep.subr.mxu0 0.0
        %290 = vmatpush1.msra.mxu0 %v280
        %291 = vmatprep.subr.mxu0 0.0
        %292 = vmatpush1.msra.mxu0 %v279
        %293 = vmatprep.subr.mxu0 0.0
        %294 = vmatpush1.msra.mxu0 %v278
        %295 = vmatprep.subr.mxu0 0.0
        %296 = vmatpush1.msra.mxu0 %v277
        %297 = vmatprep.subr.mxu0 0.0
        %298 = vmatpush1.msra.mxu0 %v276
        %299 = vmatprep.subr.mxu0 0.0
        %300 = vmatpush1.msra.mxu0 %v275
        %301 = vmatprep.subr.mxu0 0.0
        %302 = vmatpush1.msra.mxu0 %v274
        %303 = vmatprep.subr.mxu0 0.0
        %304 = vmatpush1.msra.mxu0 %v273
        %305 = vmatprep.subr.mxu0 0.0
        %306 = vmatpush1.msra.mxu0 %v272
        %307 = vmatprep.subr.mxu0 0.0
        %308 = vmatpush1.msra.mxu0 %v271
        %309 = vmatprep.subr.mxu0 0.0
        %310 = vmatpush1.msra.mxu0 %v270
        %311 = vmatprep.subr.mxu0 0.0
        %312 = vmatpush1.msra.mxu0 %v269
        %313 = vmatprep.subr.mxu0 0.0
        %314 = vmatpush1.msra.mxu0 %v268
        %315 = vmatprep.subr.mxu0 0.0
        %316 = vmatpush1.msra.mxu0 %v267
        %317 = vmatprep.subr.mxu0 0.0
        %318 = vmatpush1.msra.mxu0 %v266
        %319 = vmatprep.subr.mxu0 0.0
        %320 = vmatpush1.msra.mxu0 %v265
        %321 = vmatprep.subr.mxu0 0.0
        %322 = vmatpush2.msra.mxu0 0.0
        %323 = vmatprep.subr.mxu0 0.0
        %324 = vmatpush2.msra.mxu0 0.0
        %325 = vmatprep.subr.mxu0 0.0
        %326 = vmatpush2.msra.mxu0 0.0
        %327 = vmatprep.subr.mxu0 0.0
        %328 = vmatpush2.msra.mxu0 0.0
        %329 = vmatprep.subr.mxu0 0.0
        %330 = vmatpush2.msra.mxu0 0.0
        %331 = vmatprep.subr.mxu0 0.0
        %332 = vmatpush2.msra.mxu0 0.0
        %333 = vmatprep.subr.mxu0 0.0
        %334 = vmatpush2.msra.mxu0 0.0
        %335 = vmatprep.subr.mxu0 0.0
        %336 = vmatpush2.msra.mxu0 0.0
        %337 = vmatprep.subr.mxu0 0.0
        %338 = vmatpush2.msra.mxu0 0.0
        %339 = vmatprep.subr.mxu0 0.0
        %340 = vmatpush2.msra.mxu0 0.0
        %341 = vmatprep.subr.mxu0 0.0
        %342 = vmatpush2.msra.mxu0 0.0
        %343 = vmatprep.subr.mxu0 0.0
        %344 = vmatpush2.msra.mxu0 0.0
        %345 = vmatprep.subr.mxu0 0.0
        %346 = vmatpush2.msra.mxu0 0.0
        %347 = vmatprep.subr.mxu0 0.0
        %348 = vmatpush2.msra.mxu0 0.0
        %349 = vmatprep.subr.mxu0 0.0
        %350 = vmatpush2.msra.mxu0 0.0
        %351 = vmatprep.subr.mxu0 0.0
        %352 = vmatpush2.msra.mxu0 0.0
        %353 = vmatprep.mubr.f32.mxu0 0.0
        %354 = vmatmul.mubr.f32.gmra.mxu0 %v281
        %v355 = vpop.f32.mrf.mxu0
        %v356 = vadd.f32 %v287, %v355
        %v357 = vpop.f32.mrf.mxu0
        %358 = vdwg.mxu0
        %359 = vst [vmem:[%s252] sm:$0xff] %v356
        %s360 = sand.u32 %s121, 1
        %s361 = scalar_lea.sflag [#allocation5], %s360
        %s362 = sand.u32 %s121, 1
        %s363 = smul.addr %s362, 8
        %s364 = scalar_lea.vmem [#allocation9], %s363
        // Predicated region
        $region49: #{tpu_custom_call.1} parent=31 // pred_check
          %p365 = pneg %p131
        $region50: #{tpu_custom_call.1} parent=31 // pred_check_branch
          %367 = sbr.rel (%p365) target = $region52
        $region51: #{tpu_custom_call.1} parent=31 // pred_region
          %s369 = ssub.s32 128, 128
          %370 = vsyncadd %s361, %s369
          %s371 = smul.addr %s25, 4
          %s372 = sadd.s32 %s26, %s371
          %s373 = smul.addr %s372, 128
          %s374 = scalar_lea.hbm %s3, %s373
          %s376 = sshll.u32 %s364, 4
          %s377 = int_to_ptr.vmem [resolvable:$true] %s376
          %379 = dma.vmem_to_hbm [thread:$0]  %s377, 128, %s374, %s361
        $region52: #{tpu_custom_call.1} parent=31 // pred_fallthru
          _
      $region32: #{tpu_custom_call.1} parent=5 // pred_fallthru
        _
      %p380 = scmp.le.s32.totalorder 2, %s16
      // Predicated region
      $region53: #{tpu_custom_call.1} parent=5 // pred_check
        %p381 = pneg %p380
      $region54: #{tpu_custom_call.1} parent=5 // pred_check_branch
        %383 = sbr.rel (%p381) target = $region56
      $region55: #{tpu_custom_call.1} parent=5 // pred_region
        %s384 = ssub.s32 %s16, 2
        // Predicated region
        $region57: #{tpu_custom_call.1} parent=55 // pred_check
          %p385 = pneg %p137
        $region58: #{tpu_custom_call.1} parent=55 // pred_check_branch
          %387 = sbr.rel (%p385) target = $region60
        $region59: #{tpu_custom_call.1} parent=55 // pred_region
          %s388 = sand.u32 %s122, 1
          %s389 = scalar_lea.sflag [#allocation5], %s388
          %s390 = sand.u32 %s122, 1
          %s391 = smul.addr %s390, 8
          %s392 = scalar_lea.vmem [#allocation9], %s391
          %393 = dma.done %s389, 128
        $region60: #{tpu_custom_call.1} parent=55 // pred_fallthru
          _
      $region56: #{tpu_custom_call.1} parent=5 // pred_fallthru
        _
    $region6: #{tpu_custom_call.1} parent=1 // loop_footer
      %s20 = sadd.s32 1, %s16
    $region7: #{tpu_custom_call.1} parent=1 // loop_footer_branch
      %15 = sbr.rel target = $region3
    $region8: #{tpu_custom_call.1} parent=1 // loop_exit
      _
    %394 = vsyncpa [#allocation4], 1
    %s395 = scalar_lea.sflag [#allocation4], 1
    %396 = vsyncpa %s395, 1
    %397 = vsyncpa [#allocation7], 1
    %s398 = scalar_lea.sflag [#allocation7], 1
    %399 = vsyncpa %s398, 1
    %400 = vsyncpa [#allocation5], 1
    %s401 = scalar_lea.sflag [#allocation5], 1
    %402 = vsyncpa %s401, 1

</llo_original>
